<compile_context>
chip_gen: v7x
topology: tpu7x:2x2x1
jax: 0.10.0
libtpu: 0.0.40
codegen_flags: <defaults>
</compile_context>

<pallas_src>
import math

import jax
import jax.numpy as jnp
from jax.experimental import pallas as pl
from jax.experimental.pallas import tpu as pltpu


_SUBLANE = 8  # second-to-last-dim granularity for the batch tile


def _round_up(x, m):
    return ((x + m - 1) // m) * m


def _vmem_capacity_bytes():
    """Physical VMEM of the current generation (64 MiB fallback = v7x per-core)."""
    try:
        return int(pltpu.get_tpu_info().vmem_capacity_bytes)
    except Exception:
        return 64 << 20


def _generator_kernel(x_ref,
                      w1, b1, w2, b2, w3, b3,   # encoder (bf16 W, f32 b)
                      w4, b4, w5, b5, w6, b6,   # decoder
                      o_ref):
    """Fused 6-layer MLP on one (TB, in_dim) activation tile; weights stay resident."""

    def lin(h, w_ref, b_ref):
        # bf16 operands feed the MXU at full rate; accumulate + epilogue in f32.
        y = jnp.dot(h.astype(jnp.bfloat16), w_ref[...],
                    preferred_element_type=jnp.float32)
        return y + b_ref[...]

    h = x_ref[...]
    # encoder
    h = jnp.maximum(lin(h, w1, b1), 0.0)
    h = jnp.maximum(lin(h, w2, b2), 0.0)
    h = jnp.maximum(lin(h, w3, b3), 0.0)
    # decoder
    h = jnp.maximum(lin(h, w4, b4), 0.0)
    h = jnp.maximum(lin(h, w5, b5), 0.0)
    h = lin(h, w6, b6)                 # final Linear followed by nn.Identity()
    o_ref[...] = h.astype(o_ref.dtype)


def generator_forward(x, params, *, block_batch=512):
    """x: (B, input_dim) float32 or bfloat16.  params: [(W, b)], W:(in,out), b:(1,out)."""
    B, in_dim = x.shape
    dims = [in_dim] + [w.shape[1] for (w, _) in params]
    out_dim = dims[-1]

    # Weights pre-cast to bf16 (MXU operand dtype); biases stay f32.  No padding:
    # full-array blocks are always legal and non-128 matmul dims lower fine.
    flat = []
    for (w, b) in params:
        flat.append(w.astype(jnp.bfloat16))
        flat.append(b.reshape(1, -1).astype(jnp.float32))

    # Batch tile: multiple of 8 sublanes, large enough to amortize per-step cost.
    TB = _round_up(min(block_batch, _round_up(B, _SUBLANE)), _SUBLANE)
    grid = (pl.cdiv(B, TB),)   # no batch padding: Pallas masks the partial tail tile

    in_specs = [pl.BlockSpec((TB, in_dim), lambda i: (i, 0))]
    for arr in flat:
        # Whole array, same block every step -> VMEM-resident; single-buffered so
        # the parameter footprint is not doubled (important on v7x's 64 MiB VMEM).
        in_specs.append(
            pl.BlockSpec(arr.shape, lambda i: (0, 0), pipeline_mode=pl.Buffered(1)))
    out_specs = pl.BlockSpec((TB, out_dim), lambda i: (i, 0))

    # VMEM budget: single-buffered params + double-buffered x/out tiles + live acts.
    param_bytes = sum(int(a.size) * a.dtype.itemsize for a in flat)
    io_bytes = 2 * TB * in_dim * x.dtype.itemsize + 2 * TB * out_dim * 4
    live_bytes = 3 * TB * max(dims) * 4
    vmem_needed = param_bytes + io_bytes + live_bytes + (2 << 20)
    vmem_limit = int(min(max(vmem_needed, 32 << 20),
                         int(0.85 * _vmem_capacity_bytes())))

    # Honest scheduler hint: logical FLOPs, actually-streamed bytes.
    flops = 2 * B * sum(dims[i] * dims[i + 1] for i in range(len(params)))
    bytes_accessed = int(x.size) * x.dtype.itemsize + param_bytes + B * out_dim * 4
    cost = pl.CostEstimate(flops=int(flops), transcendentals=0,
                           bytes_accessed=int(bytes_accessed))

    return pl.pallas_call(
        _generator_kernel,
        out_shape=jax.ShapeDtypeStruct((B, out_dim), jnp.float32),
        grid=grid,
        in_specs=in_specs,
        out_specs=out_specs,
        compiler_params=pltpu.CompilerParams(
            # "parallel" lets multi-TC chips (v7x) shard batch tiles across cores.
            # TODO(synk): if profiling shows a single-TC schedule on v7x, switch to
            # pltpu.CORE_PARALLEL semantics on this axis.
            dimension_semantics=("parallel",),
            vmem_limit_bytes=vmem_limit,
        ),
        cost_estimate=cost,
    )(x, *flat)


def init_linear(key, fan_in, fan_out):
    """Deterministic init mimicking torch.nn.Linear default (uniform +/- 1/sqrt(fan_in))."""
    kw, kb = jax.random.split(key)
    bound = 1.0 / math.sqrt(fan_in)
    w = jax.random.uniform(kw, (fan_in, fan_out), jnp.float32, -bound, bound)
    b = jax.random.uniform(kb, (1, fan_out), jnp.float32, -bound, bound)
    return w, b


def make_generator_params(key, input_dim, hidden_dim, output_dim):
    dims = [(input_dim, hidden_dim),   # encoder L1
            (hidden_dim, hidden_dim),  # encoder L2
            (hidden_dim, hidden_dim),  # encoder L3
            (hidden_dim, hidden_dim),  # decoder L1
            (hidden_dim, hidden_dim),  # decoder L2
            (hidden_dim, output_dim)]  # decoder L3
    keys = jax.random.split(key, len(dims))
    return [init_linear(k, fi, fo) for k, (fi, fo) in zip(keys, dims)]


def reference_forward(x, params, *, bf16_matmul=True):
    """Pure-JAX reference. bf16_matmul=True mirrors the kernel's MXU operand dtype."""
    h = x.astype(jnp.float32)
    for i, (w, b) in enumerate(params):
        if bf16_matmul:
            y = jnp.dot(h.astype(jnp.bfloat16), w.astype(jnp.bfloat16),
                        preferred_element_type=jnp.float32) + b
        else:
            y = h @ w + b
        h = jnp.maximum(y, 0.0) if i < len(params) - 1 else y
    return h


if __name__ == "__main__":
    input_dim, hidden_dim, output_dim = 16, 32, 8
    batch = 8

    key = jax.random.PRNGKey(0)
    kx, kp = jax.random.split(key)
    x = jax.random.normal(kx, (batch, input_dim), jnp.float32)
    params = make_generator_params(kp, input_dim, hidden_dim, output_dim)

    # Stream the input as bf16: numerically identical (the first matmul consumes
    # bf16 operands regardless) and halves input HBM traffic.
    out = generator_forward(x.astype(jnp.bfloat16), params)
    jax.block_until_ready(out)
    assert out.shape == (batch, output_dim)
    assert out.dtype == jnp.float32

    # Exact-math check against a reference using the same bf16-operand matmuls.
    ref_bf16 = reference_forward(x, params, bf16_matmul=True)
    assert jnp.allclose(out, ref_bf16, atol=2e-3, rtol=2e-3)

    # Loose check against the full-f32 PyTorch-equivalent math (bf16 operand rounding).
    ref_f32 = reference_forward(x, params, bf16_matmul=False)
    assert jnp.allclose(out, ref_f32, atol=1e-1, rtol=1e-1)

    print("KERNEL_OK")
</pallas_src>

<mosaic_0001>
module attributes {stable_mosaic.version = 11 : i64} {
  func.func @_generator_kernel(%arg0: i32, %arg1: memref<8x16xbf16, #tpu.memory_space<vmem>>, %arg2: memref<16x32xbf16, #tpu.memory_space<vmem>>, %arg3: memref<1x32xf32, #tpu.memory_space<vmem>>, %arg4: memref<32x32xbf16, #tpu.memory_space<vmem>>, %arg5: memref<1x32xf32, #tpu.memory_space<vmem>>, %arg6: memref<32x32xbf16, #tpu.memory_space<vmem>>, %arg7: memref<1x32xf32, #tpu.memory_space<vmem>>, %arg8: memref<32x32xbf16, #tpu.memory_space<vmem>>, %arg9: memref<1x32xf32, #tpu.memory_space<vmem>>, %arg10: memref<32x32xbf16, #tpu.memory_space<vmem>>, %arg11: memref<1x32xf32, #tpu.memory_space<vmem>>, %arg12: memref<32x8xbf16, #tpu.memory_space<vmem>>, %arg13: memref<1x8xf32, #tpu.memory_space<vmem>>, %arg14: memref<8x8xf32, #tpu.memory_space<vmem>>) attributes {dimension_semantics = [#tpu.dimension_semantics<parallel>], iteration_bounds = array<i64: 1>, scalar_prefetch = 0 : i64, scratch_operands = 0 : i64, tpu.core_type = #tpu.core_type<tc>, window_params = [{transform_indices = @transform_0, window_bounds = array<i64: 8, 16>}, {pipeline_mode = #tpu.pipeline_mode<synchronous>, transform_indices = @transform_1, window_bounds = array<i64: 16, 32>}, {pipeline_mode = #tpu.pipeline_mode<synchronous>, transform_indices = @transform_2, window_bounds = array<i64: 1, 32>}, {pipeline_mode = #tpu.pipeline_mode<synchronous>, transform_indices = @transform_3, window_bounds = array<i64: 32, 32>}, {pipeline_mode = #tpu.pipeline_mode<synchronous>, transform_indices = @transform_4, window_bounds = array<i64: 1, 32>}, {pipeline_mode = #tpu.pipeline_mode<synchronous>, transform_indices = @transform_5, window_bounds = array<i64: 32, 32>}, {pipeline_mode = #tpu.pipeline_mode<synchronous>, transform_indices = @transform_6, window_bounds = array<i64: 1, 32>}, {pipeline_mode = #tpu.pipeline_mode<synchronous>, transform_indices = @transform_7, window_bounds = array<i64: 32, 32>}, {pipeline_mode = #tpu.pipeline_mode<synchronous>, transform_indices = @transform_8, window_bounds = array<i64: 1, 32>}, {pipeline_mode = #tpu.pipeline_mode<synchronous>, transform_indices = @transform_9, window_bounds = array<i64: 32, 32>}, {pipeline_mode = #tpu.pipeline_mode<synchronous>, transform_indices = @transform_10, window_bounds = array<i64: 1, 32>}, {pipeline_mode = #tpu.pipeline_mode<synchronous>, transform_indices = @transform_11, window_bounds = array<i64: 32, 8>}, {pipeline_mode = #tpu.pipeline_mode<synchronous>, transform_indices = @transform_12, window_bounds = array<i64: 1, 8>}, {transform_indices = @transform_13, window_bounds = array<i64: 8, 8>}]} {
    %c0 = arith.constant 0 : index
    %c0_0 = arith.constant 0 : index
    %0 = vector.load %arg1[%c0, %c0_0] : memref<8x16xbf16, #tpu.memory_space<vmem>>, vector<8x16xbf16>
    %c0_1 = arith.constant 0 : index
    %c0_2 = arith.constant 0 : index
    %1 = vector.load %arg2[%c0_1, %c0_2] : memref<16x32xbf16, #tpu.memory_space<vmem>>, vector<16x32xbf16>
    %cst = arith.constant dense<0.000000e+00> : vector<8x32xf32>
    %2 = tpu.matmul %0, %1, %cst {dimension_numbers = #tpu.dot_dimension_numbers<[1], [0], [0], [1], [0, 0, 1, 1], [], []>} : vector<8x16xbf16>, vector<16x32xbf16>, vector<8x32xf32> -> vector<8x32xf32>
    %c0_3 = arith.constant 0 : index
    %c0_4 = arith.constant 0 : index
    %3 = vector.load %arg3[%c0_3, %c0_4] : memref<1x32xf32, #tpu.memory_space<vmem>>, vector<1x32xf32>
    %4 = vector.broadcast %3 : vector<1x32xf32> to vector<8x32xf32>
    %5 = arith.addf %2, %4 : vector<8x32xf32>
    %cst_5 = arith.constant 0.000000e+00 : f32
    %6 = vector.broadcast %cst_5 : f32 to vector<8x32xf32>
    %7 = arith.maximumf %5, %6 : vector<8x32xf32>
    %8 = arith.truncf %7 : vector<8x32xf32> to vector<8x32xbf16>
    %c0_6 = arith.constant 0 : index
    %c0_7 = arith.constant 0 : index
    %9 = vector.load %arg4[%c0_6, %c0_7] : memref<32x32xbf16, #tpu.memory_space<vmem>>, vector<32x32xbf16>
    %cst_8 = arith.constant dense<0.000000e+00> : vector<8x32xf32>
    %10 = tpu.matmul %8, %9, %cst_8 {dimension_numbers = #tpu.dot_dimension_numbers<[1], [0], [0], [1], [0, 0, 1, 1], [], []>} : vector<8x32xbf16>, vector<32x32xbf16>, vector<8x32xf32> -> vector<8x32xf32>
    %c0_9 = arith.constant 0 : index
    %c0_10 = arith.constant 0 : index
    %11 = vector.load %arg5[%c0_9, %c0_10] : memref<1x32xf32, #tpu.memory_space<vmem>>, vector<1x32xf32>
    %12 = vector.broadcast %11 : vector<1x32xf32> to vector<8x32xf32>
    %13 = arith.addf %10, %12 : vector<8x32xf32>
    %cst_11 = arith.constant 0.000000e+00 : f32
    %14 = vector.broadcast %cst_11 : f32 to vector<8x32xf32>
    %15 = arith.maximumf %13, %14 : vector<8x32xf32>
    %16 = arith.truncf %15 : vector<8x32xf32> to vector<8x32xbf16>
    %c0_12 = arith.constant 0 : index
    %c0_13 = arith.constant 0 : index
    %17 = vector.load %arg6[%c0_12, %c0_13] : memref<32x32xbf16, #tpu.memory_space<vmem>>, vector<32x32xbf16>
    %cst_14 = arith.constant dense<0.000000e+00> : vector<8x32xf32>
    %18 = tpu.matmul %16, %17, %cst_14 {dimension_numbers = #tpu.dot_dimension_numbers<[1], [0], [0], [1], [0, 0, 1, 1], [], []>} : vector<8x32xbf16>, vector<32x32xbf16>, vector<8x32xf32> -> vector<8x32xf32>
    %c0_15 = arith.constant 0 : index
    %c0_16 = arith.constant 0 : index
    %19 = vector.load %arg7[%c0_15, %c0_16] : memref<1x32xf32, #tpu.memory_space<vmem>>, vector<1x32xf32>
    %20 = vector.broadcast %19 : vector<1x32xf32> to vector<8x32xf32>
    %21 = arith.addf %18, %20 : vector<8x32xf32>
    %cst_17 = arith.constant 0.000000e+00 : f32
    %22 = vector.broadcast %cst_17 : f32 to vector<8x32xf32>
    %23 = arith.maximumf %21, %22 : vector<8x32xf32>
    %24 = arith.truncf %23 : vector<8x32xf32> to vector<8x32xbf16>
    %c0_18 = arith.constant 0 : index
    %c0_19 = arith.constant 0 : index
    %25 = vector.load %arg8[%c0_18, %c0_19] : memref<32x32xbf16, #tpu.memory_space<vmem>>, vector<32x32xbf16>
    %cst_20 = arith.constant dense<0.000000e+00> : vector<8x32xf32>
    %26 = tpu.matmul %24, %25, %cst_20 {dimension_numbers = #tpu.dot_dimension_numbers<[1], [0], [0], [1], [0, 0, 1, 1], [], []>} : vector<8x32xbf16>, vector<32x32xbf16>, vector<8x32xf32> -> vector<8x32xf32>
    %c0_21 = arith.constant 0 : index
    %c0_22 = arith.constant 0 : index
    %27 = vector.load %arg9[%c0_21, %c0_22] : memref<1x32xf32, #tpu.memory_space<vmem>>, vector<1x32xf32>
    %28 = vector.broadcast %27 : vector<1x32xf32> to vector<8x32xf32>
    %29 = arith.addf %26, %28 : vector<8x32xf32>
    %cst_23 = arith.constant 0.000000e+00 : f32
    %30 = vector.broadcast %cst_23 : f32 to vector<8x32xf32>
    %31 = arith.maximumf %29, %30 : vector<8x32xf32>
    %32 = arith.truncf %31 : vector<8x32xf32> to vector<8x32xbf16>
    %c0_24 = arith.constant 0 : index
    %c0_25 = arith.constant 0 : index
    %33 = vector.load %arg10[%c0_24, %c0_25] : memref<32x32xbf16, #tpu.memory_space<vmem>>, vector<32x32xbf16>
    %cst_26 = arith.constant dense<0.000000e+00> : vector<8x32xf32>
    %34 = tpu.matmul %32, %33, %cst_26 {dimension_numbers = #tpu.dot_dimension_numbers<[1], [0], [0], [1], [0, 0, 1, 1], [], []>} : vector<8x32xbf16>, vector<32x32xbf16>, vector<8x32xf32> -> vector<8x32xf32>
    %c0_27 = arith.constant 0 : index
    %c0_28 = arith.constant 0 : index
    %35 = vector.load %arg11[%c0_27, %c0_28] : memref<1x32xf32, #tpu.memory_space<vmem>>, vector<1x32xf32>
    %36 = vector.broadcast %35 : vector<1x32xf32> to vector<8x32xf32>
    %37 = arith.addf %34, %36 : vector<8x32xf32>
    %cst_29 = arith.constant 0.000000e+00 : f32
    %38 = vector.broadcast %cst_29 : f32 to vector<8x32xf32>
    %39 = arith.maximumf %37, %38 : vector<8x32xf32>
    %40 = arith.truncf %39 : vector<8x32xf32> to vector<8x32xbf16>
    %c0_30 = arith.constant 0 : index
    %c0_31 = arith.constant 0 : index
    %41 = vector.load %arg12[%c0_30, %c0_31] : memref<32x8xbf16, #tpu.memory_space<vmem>>, vector<32x8xbf16>
    %cst_32 = arith.constant dense<0.000000e+00> : vector<8x8xf32>
    %42 = tpu.matmul %40, %41, %cst_32 {dimension_numbers = #tpu.dot_dimension_numbers<[1], [0], [0], [1], [0, 0, 1, 1], [], []>} : vector<8x32xbf16>, vector<32x8xbf16>, vector<8x8xf32> -> vector<8x8xf32>
    %c0_33 = arith.constant 0 : index
    %c0_34 = arith.constant 0 : index
    %43 = vector.load %arg13[%c0_33, %c0_34] : memref<1x8xf32, #tpu.memory_space<vmem>>, vector<1x8xf32>
    %44 = vector.broadcast %43 : vector<1x8xf32> to vector<8x8xf32>
    %45 = arith.addf %42, %44 : vector<8x8xf32>
    %c0_35 = arith.constant 0 : index
    %c0_36 = arith.constant 0 : index
    %46 = vector.load %arg14[%c0_35, %c0_36] : memref<8x8xf32, #tpu.memory_space<vmem>>, vector<8x8xf32>
    tpu.vector_store %arg14[%c0_35, %c0_36], %45 {strides = array<i32>} : memref<8x8xf32, #tpu.memory_space<vmem>>, vector<8x8xf32>,
    return
  }
  func.func @transform_0(%arg0: i32) -> (i32, i32) {
    %c0_i32 = arith.constant 0 : i32
    %c0_i32_0 = arith.constant 0 : i32
    return %arg0, %c0_i32 : i32, i32
  }
  func.func @transform_1(%arg0: i32) -> (i32, i32) {
    %c0_i32 = arith.constant 0 : i32
    %c0_i32_0 = arith.constant 0 : i32
    %c0_i32_1 = arith.constant 0 : i32
    return %c0_i32, %c0_i32_0 : i32, i32
  }
  func.func @transform_2(%arg0: i32) -> (i32, i32) {
    %c0_i32 = arith.constant 0 : i32
    %c0_i32_0 = arith.constant 0 : i32
    %c0_i32_1 = arith.constant 0 : i32
    return %c0_i32, %c0_i32_0 : i32, i32
  }
  func.func @transform_3(%arg0: i32) -> (i32, i32) {
    %c0_i32 = arith.constant 0 : i32
    %c0_i32_0 = arith.constant 0 : i32
    %c0_i32_1 = arith.constant 0 : i32
    return %c0_i32, %c0_i32_0 : i32, i32
  }
  func.func @transform_4(%arg0: i32) -> (i32, i32) {
    %c0_i32 = arith.constant 0 : i32
    %c0_i32_0 = arith.constant 0 : i32
    %c0_i32_1 = arith.constant 0 : i32
    return %c0_i32, %c0_i32_0 : i32, i32
  }
  func.func @transform_5(%arg0: i32) -> (i32, i32) {
    %c0_i32 = arith.constant 0 : i32
    %c0_i32_0 = arith.constant 0 : i32
    %c0_i32_1 = arith.constant 0 : i32
    return %c0_i32, %c0_i32_0 : i32, i32
  }
  func.func @transform_6(%arg0: i32) -> (i32, i32) {
    %c0_i32 = arith.constant 0 : i32
    %c0_i32_0 = arith.constant 0 : i32
    %c0_i32_1 = arith.constant 0 : i32
    return %c0_i32, %c0_i32_0 : i32, i32
  }
  func.func @transform_7(%arg0: i32) -> (i32, i32) {
    %c0_i32 = arith.constant 0 : i32
    %c0_i32_0 = arith.constant 0 : i32
    %c0_i32_1 = arith.constant 0 : i32
    return %c0_i32, %c0_i32_0 : i32, i32
  }
  func.func @transform_8(%arg0: i32) -> (i32, i32) {
    %c0_i32 = arith.constant 0 : i32
    %c0_i32_0 = arith.constant 0 : i32
    %c0_i32_1 = arith.constant 0 : i32
    return %c0_i32, %c0_i32_0 : i32, i32
  }
  func.func @transform_9(%arg0: i32) -> (i32, i32) {
    %c0_i32 = arith.constant 0 : i32
    %c0_i32_0 = arith.constant 0 : i32
    %c0_i32_1 = arith.constant 0 : i32
    return %c0_i32, %c0_i32_0 : i32, i32
  }
  func.func @transform_10(%arg0: i32) -> (i32, i32) {
    %c0_i32 = arith.constant 0 : i32
    %c0_i32_0 = arith.constant 0 : i32
    %c0_i32_1 = arith.constant 0 : i32
    return %c0_i32, %c0_i32_0 : i32, i32
  }
  func.func @transform_11(%arg0: i32) -> (i32, i32) {
    %c0_i32 = arith.constant 0 : i32
    %c0_i32_0 = arith.constant 0 : i32
    %c0_i32_1 = arith.constant 0 : i32
    return %c0_i32, %c0_i32_0 : i32, i32
  }
  func.func @transform_12(%arg0: i32) -> (i32, i32) {
    %c0_i32 = arith.constant 0 : i32
    %c0_i32_0 = arith.constant 0 : i32
    %c0_i32_1 = arith.constant 0 : i32
    return %c0_i32, %c0_i32_0 : i32, i32
  }
  func.func @transform_13(%arg0: i32) -> (i32, i32) {
    %c0_i32 = arith.constant 0 : i32
    %c0_i32_0 = arith.constant 0 : i32
    return %arg0, %c0_i32 : i32, i32
  }
}

</mosaic_0001>

<llo_original>
// kernel: tpu_custom_call.1
$region0: #{tpu_custom_call.1}
  #allocation0 [shape = 'u32[]', space=smem, size = 0x4, offset = 0x4, fixed_abs, tag = 'smem constant byte address 0x4 - core index']
  #allocation1 [shape = 'u32[144,128]{1,0:T(1,128)}', space=vmem, size = 0x12000, scoped, tag = 'internal scratch']
  %s0 = inlined_call_operand.hbm [shape: bf16[8,16], index: 0, kind: input, shape index: {}]
  %s1 = inlined_call_operand.hbm [shape: bf16[16,32], index: 1, kind: input, shape index: {}]
  %s2 = inlined_call_operand.vmem [shape: f32[1,32], index: 2, kind: input, shape index: {}]
  %s3 = inlined_call_operand.vmem [shape: bf16[32,32], index: 3, kind: input, shape index: {}]
  %s4 = inlined_call_operand.vmem [shape: f32[1,32], index: 4, kind: input, shape index: {}]
  %s5 = inlined_call_operand.vmem [shape: bf16[32,32], index: 5, kind: input, shape index: {}]
  %s6 = inlined_call_operand.hbm [shape: f32[1,32], index: 6, kind: input, shape index: {}]
  %s7 = inlined_call_operand.hbm [shape: bf16[32,32], index: 7, kind: input, shape index: {}]
  %s8 = inlined_call_operand.hbm [shape: f32[1,32], index: 8, kind: input, shape index: {}]
  %s9 = inlined_call_operand.vmem [shape: bf16[32,32], index: 9, kind: input, shape index: {}]
  %s10 = inlined_call_operand.vmem [shape: f32[1,32], index: 10, kind: input, shape index: {}]
  %s11 = inlined_call_operand.vmem [shape: bf16[32,8], index: 11, kind: input, shape index: {}]
  %s12 = inlined_call_operand.vmem [shape: f32[1,8], index: 12, kind: input, shape index: {}]
  %s13 = inlined_call_operand.hbm [shape: f32[8,8], index: 13, kind: output, shape index: {}]
  %s14 = sld [smem:[#allocation0]]
  $region82: #{tpu_custom_call.1} parent=0
    _
  %s16 = ssub.s32 1, %s14
  %s17 = scalar_select 0, %s16, %s14
  $region1: #{tpu_custom_call.1} parent=0
    #allocation2 [shape = 'u8[2048]{0}', space=vmem, size = 0x800, scoped, tag = 'input window, operand 0, single buffered']
    #allocation3 [shape = 's32[1]{0}', space=sflag, size = 0x4, scoped, tag = 'scoped memory for tpu_custom_call.1']
    #allocation4 [shape = 's32[1]{0}', space=sflag, size = 0x4, scoped, tag = 'scoped memory for tpu_custom_call.1']
    #allocation5 [shape = 'u8[4096]{0}', space=vmem, size = 0x1000, scoped, tag = 'input window, operand 1, single buffered']
    #allocation6 [shape = 's32[1]{0}', space=sflag, size = 0x4, scoped, tag = 'scoped memory for tpu_custom_call.1']
    #allocation7 [shape = 'u8[512]{0}', space=vmem, size = 0x400, scoped, tag = 'input window, operand 6, single buffered']
    #allocation8 [shape = 'u8[8192]{0}', space=vmem, size = 0x2000, scoped, tag = 'input window, operand 7, single buffered']
    #allocation9 [shape = 's32[1]{0}', space=sflag, size = 0x4, scoped, tag = 'scoped memory for tpu_custom_call.1']
    #allocation10 [shape = 'u8[512]{0}', space=vmem, size = 0x400, scoped, tag = 'input window, operand 8, single buffered']
    #allocation11 [shape = 'u8[4096]{0}', space=vmem, size = 0x1000, scoped, tag = 'output window, operand 0, single buffered']
    %18 = vsyncpa [#allocation3], 0
    %19 = vsyncpa [#allocation6], 0
    %20 = vsyncpa [#allocation9], 0
    %21 = vsyncpa [#allocation4], 0
    // Predicated region
    $region2: #{tpu_custom_call.1} parent=1 // pred_check
      _
    $region3: #{tpu_custom_call.1} parent=1 // pred_check_branch
      %23 = sbr.rel (0) target = $region5
    $region4: #{tpu_custom_call.1} parent=1 // pred_region
      %s25 = ssub.s32 64, 64
      %26 = vsyncadd [#allocation3], %s25
      %s28 = sshll.u32 [#allocation2], 4
      %s29 = int_to_ptr.vmem [resolvable:$true] %s28
      %31 = dma.hbm_to_vmem [thread:$0]  %s0, 64, %s29, [#allocation3]
    $region5: #{tpu_custom_call.1} parent=1 // pred_fallthru
      _
    // Predicated region
    $region6: #{tpu_custom_call.1} parent=1 // pred_check
      _
    $region7: #{tpu_custom_call.1} parent=1 // pred_check_branch
      %33 = sbr.rel (0) target = $region9
    $region8: #{tpu_custom_call.1} parent=1 // pred_region
      %s35 = ssub.s32 128, 128
      %36 = vsyncadd [#allocation6], %s35
      %s37 = sshll.u32 [#allocation5], 4
      %s38 = int_to_ptr.vmem [resolvable:$true] %s37
      %43 = dma.hbm_to_vmem [thread:$0]  %s1, 128, %s38, [#allocation6], 64, 64, 4
    $region9: #{tpu_custom_call.1} parent=1 // pred_fallthru
      _
    // Predicated region
    $region10: #{tpu_custom_call.1} parent=1 // pred_check
      _
    $region11: #{tpu_custom_call.1} parent=1 // pred_check_branch
      %45 = sbr.rel (0) target = $region13
    $region12: #{tpu_custom_call.1} parent=1 // pred_region
      _
    $region13: #{tpu_custom_call.1} parent=1 // pred_fallthru
      _
    // Predicated region
    $region14: #{tpu_custom_call.1} parent=1 // pred_check
      _
    $region15: #{tpu_custom_call.1} parent=1 // pred_check_branch
      %47 = sbr.rel (0) target = $region17
    $region16: #{tpu_custom_call.1} parent=1 // pred_region
      _
    $region17: #{tpu_custom_call.1} parent=1 // pred_fallthru
      _
    // Predicated region
    $region18: #{tpu_custom_call.1} parent=1 // pred_check
      _
    $region19: #{tpu_custom_call.1} parent=1 // pred_check_branch
      %49 = sbr.rel (0) target = $region21
    $region20: #{tpu_custom_call.1} parent=1 // pred_region
      _
    $region21: #{tpu_custom_call.1} parent=1 // pred_fallthru
      _
    // Predicated region
    $region22: #{tpu_custom_call.1} parent=1 // pred_check
      _
    $region23: #{tpu_custom_call.1} parent=1 // pred_check_branch
      %51 = sbr.rel (0) target = $region25
    $region24: #{tpu_custom_call.1} parent=1 // pred_region
      _
    $region25: #{tpu_custom_call.1} parent=1 // pred_fallthru
      _
    // Predicated region
    $region26: #{tpu_custom_call.1} parent=1 // pred_check
      _
    $region27: #{tpu_custom_call.1} parent=1 // pred_check_branch
      %53 = sbr.rel (0) target = $region29
    $region28: #{tpu_custom_call.1} parent=1 // pred_region
      %s55 = ssub.s32 16, 16
      %56 = vsyncadd [#allocation6], %s55
      %s58 = sshll.u32 [#allocation7], 4
      %s59 = int_to_ptr.vmem [resolvable:$true] %s58
      %61 = dma.hbm_to_vmem [thread:$0]  %s6, 16, %s59, [#allocation6]
    $region29: #{tpu_custom_call.1} parent=1 // pred_fallthru
      _
    // Predicated region
    $region30: #{tpu_custom_call.1} parent=1 // pred_check
      _
    $region31: #{tpu_custom_call.1} parent=1 // pred_check_branch
      %63 = sbr.rel (0) target = $region33
    $region32: #{tpu_custom_call.1} parent=1 // pred_region
      %s65 = ssub.s32 256, 256
      %66 = vsyncadd [#allocation9], %s65
      %s67 = sshll.u32 [#allocation8], 4
      %s68 = int_to_ptr.vmem [resolvable:$true] %s67
      %73 = dma.hbm_to_vmem [thread:$0]  %s7, 256, %s68, [#allocation9], 64, 64, 4
    $region33: #{tpu_custom_call.1} parent=1 // pred_fallthru
      _
    // Predicated region
    $region34: #{tpu_custom_call.1} parent=1 // pred_check
      _
    $region35: #{tpu_custom_call.1} parent=1 // pred_check_branch
      %75 = sbr.rel (0) target = $region37
    $region36: #{tpu_custom_call.1} parent=1 // pred_region
      %s77 = ssub.s32 16, 16
      %78 = vsyncadd [#allocation9], %s77
      %s80 = sshll.u32 [#allocation10], 4
      %s81 = int_to_ptr.vmem [resolvable:$true] %s80
      %83 = dma.hbm_to_vmem [thread:$0]  %s8, 16, %s81, [#allocation9]
    $region37: #{tpu_custom_call.1} parent=1 // pred_fallthru
      _
    // Predicated region
    $region38: #{tpu_custom_call.1} parent=1 // pred_check
      _
    $region39: #{tpu_custom_call.1} parent=1 // pred_check_branch
      %85 = sbr.rel (0) target = $region41
    $region40: #{tpu_custom_call.1} parent=1 // pred_region
      _
    $region41: #{tpu_custom_call.1} parent=1 // pred_fallthru
      _
    // Predicated region
    $region42: #{tpu_custom_call.1} parent=1 // pred_check
      _
    $region43: #{tpu_custom_call.1} parent=1 // pred_check_branch
      %87 = sbr.rel (0) target = $region45
    $region44: #{tpu_custom_call.1} parent=1 // pred_region
      _
    $region45: #{tpu_custom_call.1} parent=1 // pred_fallthru
      _
    // Predicated region
    $region46: #{tpu_custom_call.1} parent=1 // pred_check
      _
    $region47: #{tpu_custom_call.1} parent=1 // pred_check_branch
      %89 = sbr.rel (0) target = $region49
    $region48: #{tpu_custom_call.1} parent=1 // pred_region
      _
    $region49: #{tpu_custom_call.1} parent=1 // pred_fallthru
      _
    // Predicated region
    $region50: #{tpu_custom_call.1} parent=1 // pred_check
      _
    $region51: #{tpu_custom_call.1} parent=1 // pred_check_branch
      %91 = sbr.rel (0) target = $region53
    $region52: #{tpu_custom_call.1} parent=1 // pred_region
      _
    $region53: #{tpu_custom_call.1} parent=1 // pred_fallthru
      _
    // Predicated region
    $region54: #{tpu_custom_call.1} parent=1 // pred_check
      _
    $region55: #{tpu_custom_call.1} parent=1 // pred_check_branch
      %93 = sbr.rel (0) target = $region57
    $region56: #{tpu_custom_call.1} parent=1 // pred_region
      %94 = dma.done [#allocation3], 64
    $region57: #{tpu_custom_call.1} parent=1 // pred_fallthru
      _
    // Predicated region
    $region58: #{tpu_custom_call.1} parent=1 // pred_check
      _
    $region59: #{tpu_custom_call.1} parent=1 // pred_check_branch
      %96 = sbr.rel (0) target = $region61
    $region60: #{tpu_custom_call.1} parent=1 // pred_region
      %97 = dma.done [#allocation6], 128
    $region61: #{tpu_custom_call.1} parent=1 // pred_fallthru
      _
    // Predicated region
    $region62: #{tpu_custom_call.1} parent=1 // pred_check
      _
    $region63: #{tpu_custom_call.1} parent=1 // pred_check_branch
      %99 = sbr.rel (0) target = $region65
    $region64: #{tpu_custom_call.1} parent=1 // pred_region
      %100 = dma.done [#allocation6], 16
    $region65: #{tpu_custom_call.1} parent=1 // pred_fallthru
      _
    // Predicated region
    $region66: #{tpu_custom_call.1} parent=1 // pred_check
      _
    $region67: #{tpu_custom_call.1} parent=1 // pred_check_branch
      %102 = sbr.rel (0) target = $region69
    $region68: #{tpu_custom_call.1} parent=1 // pred_region
      %103 = dma.done [#allocation9], 256
    $region69: #{tpu_custom_call.1} parent=1 // pred_fallthru
      _
    // Predicated region
    $region70: #{tpu_custom_call.1} parent=1 // pred_check
      _
    $region71: #{tpu_custom_call.1} parent=1 // pred_check_branch
      %105 = sbr.rel (0) target = $region73
    $region72: #{tpu_custom_call.1} parent=1 // pred_region
      %106 = dma.done [#allocation9], 16
    $region73: #{tpu_custom_call.1} parent=1 // pred_fallthru
      _
    %v108 = vld [vmem:[#allocation2] sm:$0xf]
    %v109 = vld [vmem:[#allocation5] sm:$0xf]
    %v110 = vld [vmem:[#allocation5 + $0x4] sm:$0xf]
    %v111 = vld [vmem:[%s2] sm:$0x1]
    %v113 = vlaneseq
    %v114 = vshrl.u32 %v113, 7
    %v115 = vsub.s32 0, %v114
    %v116 = vrot.slane %v111, %v115
    %v120 = vunpack.c.l.b16 %v109
    %v121 = vunpack.c.l.b16 %v110
    %v122 = vpack.c.b16 %v121, %v120
    %vm124 = vcmask 130048
    %v126 = vsel %vm124, %v108, 0
    %128 = vmatprep.subr.bf16.mxu0 0
    %129 = vmatpush1.bf16.msra.mxu0 %v122
    %130 = vmatprep.subr.bf16.mxu0 0
    %131 = vmatpush1.bf16.msra.mxu0 0
    %132 = vmatprep.subr.bf16.mxu0 0
    %133 = vmatpush1.bf16.msra.mxu0 0
    %134 = vmatprep.subr.bf16.mxu0 0
    %135 = vmatpush1.bf16.msra.mxu0 0
    %136 = vmatprep.subr.bf16.mxu0 0
    %137 = vmatpush1.bf16.msra.mxu0 0
    %138 = vmatprep.subr.bf16.mxu0 0
    %139 = vmatpush1.bf16.msra.mxu0 0
    %140 = vmatprep.subr.bf16.mxu0 0
    %141 = vmatpush1.bf16.msra.mxu0 0
    %142 = vmatprep.subr.bf16.mxu0 0
    %143 = vmatpush1.bf16.msra.mxu0 0
    %144 = vmatprep.subr.bf16.mxu0 0
    %145 = vmatpush1.bf16.msra.mxu0 0
    %146 = vmatprep.subr.bf16.mxu0 0
    %147 = vmatpush1.bf16.msra.mxu0 0
    %148 = vmatprep.subr.bf16.mxu0 0
    %149 = vmatpush1.bf16.msra.mxu0 0
    %150 = vmatprep.subr.bf16.mxu0 0
    %151 = vmatpush1.bf16.msra.mxu0 0
    %152 = vmatprep.subr.bf16.mxu0 0
    %153 = vmatpush1.bf16.msra.mxu0 0
    %154 = vmatprep.subr.bf16.mxu0 0
    %155 = vmatpush1.bf16.msra.mxu0 0
    %156 = vmatprep.subr.bf16.mxu0 0
    %157 = vmatpush1.bf16.msra.mxu0 0
    %158 = vmatprep.subr.bf16.mxu0 0
    %159 = vmatpush1.bf16.msra.mxu0 0
    %160 = vmatprep.mubr.bf16.mxu0 0
    %161 = vmatmul.mubr.bf16.gmra.mrb[0].mxu0 %v126
    %v162 = vpop.f32.mrb[0].mxu0
    %v163 = vadd.f32 %v116, %v162
    %v164 = vpop.f32.mrb[0].mxu0
    %v165 = vpop.f32.mrb[0].mxu0
    %v166 = vpop.f32.mrb[0].mxu0
    %167 = vdwg.mxu0
    %v168 = vmax.f32 %v163, 0.0
    %v169 = vpack.c.bf16 %v168, %v168
    %v170 = vld [vmem:[%s3] sm:$0xf]
    %v171 = vld [vmem:[%s3 + $0x4] sm:$0xf]
    %v172 = vld [vmem:[%s3 + $0x8] sm:$0xf]
    %v173 = vld [vmem:[%s3 + $0xc] sm:$0xf]
    %v174 = vld [vmem:[%s4] sm:$0x1]
    %v176 = vlaneseq
    %v177 = vshrl.u32 %v176, 7
    %v178 = vsub.s32 0, %v177
    %v179 = vrot.slane %v174, %v178
    %v185 = vunpack.c.l.b16 %v170
    %v186 = vunpack.c.l.b16 %v171
    %v187 = vunpack.c.l.b16 %v172
    %v188 = vunpack.c.l.b16 %v173
    %v189 = vpack.c.b16 %v186, %v185
    %v190 = vpack.c.b16 %v188, %v187
    %vm193 = vcmask 261120
    %v195 = vsel %vm193, %v169, 0
    %197 = vmatprep.subr.bf16.mxu0 0
    %198 = vmatpush1.bf16.msra.mxu0 %v189
    %199 = vmatprep.subr.bf16.mxu0 0
    %200 = vmatpush1.bf16.msra.mxu0 %v190
    %201 = vmatprep.subr.bf16.mxu0 0
    %202 = vmatpush1.bf16.msra.mxu0 0
    %203 = vmatprep.subr.bf16.mxu0 0
    %204 = vmatpush1.bf16.msra.mxu0 0
    %205 = vmatprep.subr.bf16.mxu0 0
    %206 = vmatpush1.bf16.msra.mxu0 0
    %207 = vmatprep.subr.bf16.mxu0 0
    %208 = vmatpush1.bf16.msra.mxu0 0
    %209 = vmatprep.subr.bf16.mxu0 0
    %210 = vmatpush1.bf16.msra.mxu0 0
    %211 = vmatprep.subr.bf16.mxu0 0
    %212 = vmatpush1.bf16.msra.mxu0 0
    %213 = vmatprep.subr.bf16.mxu0 0
    %214 = vmatpush1.bf16.msra.mxu0 0
    %215 = vmatprep.subr.bf16.mxu0 0
    %216 = vmatpush1.bf16.msra.mxu0 0
    %217 = vmatprep.subr.bf16.mxu0 0
    %218 = vmatpush1.bf16.msra.mxu0 0
    %219 = vmatprep.subr.bf16.mxu0 0
    %220 = vmatpush1.bf16.msra.mxu0 0
    %221 = vmatprep.subr.bf16.mxu0 0
    %222 = vmatpush1.bf16.msra.mxu0 0
    %223 = vmatprep.subr.bf16.mxu0 0
    %224 = vmatpush1.bf16.msra.mxu0 0
    %225 = vmatprep.subr.bf16.mxu0 0
    %226 = vmatpush1.bf16.msra.mxu0 0
    %227 = vmatprep.subr.bf16.mxu0 0
    %228 = vmatpush1.bf16.msra.mxu0 0
    %229 = vmatprep.mubr.bf16.mxu0 0
    %230 = vmatmul.mubr.bf16.gmra.mrb[0].mxu0 %v195
    %v231 = vpop.f32.mrb[0].mxu0
    %v232 = vadd.f32 %v179, %v231
    %v233 = vpop.f32.mrb[0].mxu0
    %v234 = vpop.f32.mrb[0].mxu0
    %v235 = vpop.f32.mrb[0].mxu0
    %236 = vdwg.mxu0
    %v237 = vmax.f32 %v232, 0.0
    %v238 = vpack.c.bf16 %v237, %v237
    %v239 = vld [vmem:[%s5] sm:$0xf]
    %v240 = vld [vmem:[%s5 + $0x4] sm:$0xf]
    %v241 = vld [vmem:[%s5 + $0x8] sm:$0xf]
    %v242 = vld [vmem:[%s5 + $0xc] sm:$0xf]
    %v243 = vld [vmem:[#allocation7] sm:$0x1]
    %v245 = vlaneseq
    %v246 = vshrl.u32 %v245, 7
    %v247 = vsub.s32 0, %v246
    %v248 = vrot.slane %v243, %v247
    %v254 = vunpack.c.l.b16 %v239
    %v255 = vunpack.c.l.b16 %v240
    %v256 = vunpack.c.l.b16 %v241
    %v257 = vunpack.c.l.b16 %v242
    %v258 = vpack.c.b16 %v255, %v254
    %v259 = vpack.c.b16 %v257, %v256
    %v263 = vsel %vm193, %v238, 0
    %265 = vmatprep.subr.bf16.mxu0 0
    %266 = vmatpush1.bf16.msra.mxu0 %v258
    %267 = vmatprep.subr.bf16.mxu0 0
    %268 = vmatpush1.bf16.msra.mxu0 %v259
    %269 = vmatprep.subr.bf16.mxu0 0
    %270 = vmatpush1.bf16.msra.mxu0 0
    %271 = vmatprep.subr.bf16.mxu0 0
    %272 = vmatpush1.bf16.msra.mxu0 0
    %273 = vmatprep.subr.bf16.mxu0 0
    %274 = vmatpush1.bf16.msra.mxu0 0
    %275 = vmatprep.subr.bf16.mxu0 0
    %276 = vmatpush1.bf16.msra.mxu0 0
    %277 = vmatprep.subr.bf16.mxu0 0
    %278 = vmatpush1.bf16.msra.mxu0 0
    %279 = vmatprep.subr.bf16.mxu0 0
    %280 = vmatpush1.bf16.msra.mxu0 0
    %281 = vmatprep.subr.bf16.mxu0 0
    %282 = vmatpush1.bf16.msra.mxu0 0
    %283 = vmatprep.subr.bf16.mxu0 0
    %284 = vmatpush1.bf16.msra.mxu0 0
    %285 = vmatprep.subr.bf16.mxu0 0
    %286 = vmatpush1.bf16.msra.mxu0 0
    %287 = vmatprep.subr.bf16.mxu0 0
    %288 = vmatpush1.bf16.msra.mxu0 0
    %289 = vmatprep.subr.bf16.mxu0 0
    %290 = vmatpush1.bf16.msra.mxu0 0
    %291 = vmatprep.subr.bf16.mxu0 0
    %292 = vmatpush1.bf16.msra.mxu0 0
    %293 = vmatprep.subr.bf16.mxu0 0
    %294 = vmatpush1.bf16.msra.mxu0 0
    %295 = vmatprep.subr.bf16.mxu0 0
    %296 = vmatpush1.bf16.msra.mxu0 0
    %297 = vmatprep.mubr.bf16.mxu0 0
    %298 = vmatmul.mubr.bf16.gmra.mrb[0].mxu0 %v263
    %v299 = vpop.f32.mrb[0].mxu0
    %v300 = vadd.f32 %v248, %v299
    %v301 = vpop.f32.mrb[0].mxu0
    %v302 = vpop.f32.mrb[0].mxu0
    %v303 = vpop.f32.mrb[0].mxu0
    %304 = vdwg.mxu0
    %v305 = vmax.f32 %v300, 0.0
    %v306 = vpack.c.bf16 %v305, %v305
    %v307 = vld [vmem:[#allocation8] sm:$0xf]
    %v308 = vld [vmem:[#allocation8 + $0x4] sm:$0xf]
    %v309 = vld [vmem:[#allocation8 + $0x8] sm:$0xf]
    %v310 = vld [vmem:[#allocation8 + $0xc] sm:$0xf]
    %v311 = vld [vmem:[#allocation10] sm:$0x1]
    %v313 = vlaneseq
    %v314 = vshrl.u32 %v313, 7
    %v315 = vsub.s32 0, %v314
    %v316 = vrot.slane %v311, %v315
    %v322 = vunpack.c.l.b16 %v307
    %v323 = vunpack.c.l.b16 %v308
    %v324 = vunpack.c.l.b16 %v309
    %v325 = vunpack.c.l.b16 %v310
    %v326 = vpack.c.b16 %v323, %v322
    %v327 = vpack.c.b16 %v325, %v324
    %v331 = vsel %vm193, %v306, 0
    %333 = vmatprep.subr.bf16.mxu0 0
    %334 = vmatpush1.bf16.msra.mxu0 %v326
    %335 = vmatprep.subr.bf16.mxu0 0
    %336 = vmatpush1.bf16.msra.mxu0 %v327
    %337 = vmatprep.subr.bf16.mxu0 0
    %338 = vmatpush1.bf16.msra.mxu0 0
    %339 = vmatprep.subr.bf16.mxu0 0
    %340 = vmatpush1.bf16.msra.mxu0 0
    %341 = vmatprep.subr.bf16.mxu0 0
    %342 = vmatpush1.bf16.msra.mxu0 0
    %343 = vmatprep.subr.bf16.mxu0 0
    %344 = vmatpush1.bf16.msra.mxu0 0
    %345 = vmatprep.subr.bf16.mxu0 0
    %346 = vmatpush1.bf16.msra.mxu0 0
    %347 = vmatprep.subr.bf16.mxu0 0
    %348 = vmatpush1.bf16.msra.mxu0 0
    %349 = vmatprep.subr.bf16.mxu0 0
    %350 = vmatpush1.bf16.msra.mxu0 0
    %351 = vmatprep.subr.bf16.mxu0 0
    %352 = vmatpush1.bf16.msra.mxu0 0
    %353 = vmatprep.subr.bf16.mxu0 0
    %354 = vmatpush1.bf16.msra.mxu0 0
    %355 = vmatprep.subr.bf16.mxu0 0
    %356 = vmatpush1.bf16.msra.mxu0 0
    %357 = vmatprep.subr.bf16.mxu0 0
    %358 = vmatpush1.bf16.msra.mxu0 0
    %359 = vmatprep.subr.bf16.mxu0 0
    %360 = vmatpush1.bf16.msra.mxu0 0
    %361 = vmatprep.subr.bf16.mxu0 0
    %362 = vmatpush1.bf16.msra.mxu0 0
    %363 = vmatprep.subr.bf16.mxu0 0
    %364 = vmatpush1.bf16.msra.mxu0 0
    %365 = vmatprep.mubr.bf16.mxu0 0
    %366 = vmatmul.mubr.bf16.gmra.mrb[0].mxu0 %v331
    %v367 = vpop.f32.mrb[0].mxu0
    %v368 = vadd.f32 %v316, %v367
    %v369 = vpop.f32.mrb[0].mxu0
    %v370 = vpop.f32.mrb[0].mxu0
    %v371 = vpop.f32.mrb[0].mxu0
    %372 = vdwg.mxu0
    %v373 = vmax.f32 %v368, 0.0
    %v374 = vpack.c.bf16 %v373, %v373
    %v375 = vld [vmem:[%s9] sm:$0xf]
    %v376 = vld [vmem:[%s9 + $0x4] sm:$0xf]
    %v377 = vld [vmem:[%s9 + $0x8] sm:$0xf]
    %v378 = vld [vmem:[%s9 + $0xc] sm:$0xf]
    %v379 = vld [vmem:[%s10] sm:$0x1]
    %v381 = vlaneseq
    %v382 = vshrl.u32 %v381, 7
    %v383 = vsub.s32 0, %v382
    %v384 = vrot.slane %v379, %v383
    %v390 = vunpack.c.l.b16 %v375
    %v391 = vunpack.c.l.b16 %v376
    %v392 = vunpack.c.l.b16 %v377
    %v393 = vunpack.c.l.b16 %v378
    %v394 = vpack.c.b16 %v391, %v390
    %v395 = vpack.c.b16 %v393, %v392
    %v399 = vsel %vm193, %v374, 0
    %401 = vmatprep.subr.bf16.mxu0 0
    %402 = vmatpush1.bf16.msra.mxu0 %v394
    %403 = vmatprep.subr.bf16.mxu0 0
    %404 = vmatpush1.bf16.msra.mxu0 %v395
    %405 = vmatprep.subr.bf16.mxu0 0
    %406 = vmatpush1.bf16.msra.mxu0 0
    %407 = vmatprep.subr.bf16.mxu0 0
    %408 = vmatpush1.bf16.msra.mxu0 0
    %409 = vmatprep.subr.bf16.mxu0 0
    %410 = vmatpush1.bf16.msra.mxu0 0
    %411 = vmatprep.subr.bf16.mxu0 0
    %412 = vmatpush1.bf16.msra.mxu0 0
    %413 = vmatprep.subr.bf16.mxu0 0
    %414 = vmatpush1.bf16.msra.mxu0 0
    %415 = vmatprep.subr.bf16.mxu0 0
    %416 = vmatpush1.bf16.msra.mxu0 0
    %417 = vmatprep.subr.bf16.mxu0 0
    %418 = vmatpush1.bf16.msra.mxu0 0
    %419 = vmatprep.subr.bf16.mxu0 0
    %420 = vmatpush1.bf16.msra.mxu0 0
    %421 = vmatprep.subr.bf16.mxu0 0
    %422 = vmatpush1.bf16.msra.mxu0 0
    %423 = vmatprep.subr.bf16.mxu0 0
    %424 = vmatpush1.bf16.msra.mxu0 0
    %425 = vmatprep.subr.bf16.mxu0 0
    %426 = vmatpush1.bf16.msra.mxu0 0
    %427 = vmatprep.subr.bf16.mxu0 0
    %428 = vmatpush1.bf16.msra.mxu0 0
    %429 = vmatprep.subr.bf16.mxu0 0
    %430 = vmatpush1.bf16.msra.mxu0 0
    %431 = vmatprep.subr.bf16.mxu0 0
    %432 = vmatpush1.bf16.msra.mxu0 0
    %433 = vmatprep.mubr.bf16.mxu0 0
    %434 = vmatmul.mubr.bf16.gmra.mrb[0].mxu0 %v399
    %v435 = vpop.f32.mrb[0].mxu0
    %v436 = vadd.f32 %v384, %v435
    %v437 = vpop.f32.mrb[0].mxu0
    %v438 = vpop.f32.mrb[0].mxu0
    %v439 = vpop.f32.mrb[0].mxu0
    %440 = vdwg.mxu0
    %v441 = vmax.f32 %v436, 0.0
    %v442 = vpack.c.bf16 %v441, %v441
    %v443 = vld [vmem:[%s11] sm:$0xf]
    %v444 = vld [vmem:[%s11 + $0x4] sm:$0xf]
    %v445 = vld [vmem:[%s11 + $0x8] sm:$0xf]
    %v446 = vld [vmem:[%s11 + $0xc] sm:$0xf]
    %v447 = vld [vmem:[%s12] sm:$0x1]
    %v449 = vlaneseq
    %v450 = vshrl.u32 %v449, 7
    %v451 = vsub.s32 0, %v450
    %v452 = vrot.slane %v447, %v451
    %v458 = vunpack.c.l.b16 %v443
    %v459 = vunpack.c.l.b16 %v444
    %v460 = vunpack.c.l.b16 %v445
    %v461 = vunpack.c.l.b16 %v446
    %v462 = vpack.c.b16 %v459, %v458
    %v463 = vpack.c.b16 %v461, %v460
    %v467 = vsel %vm193, %v442, 0
    %469 = vmatprep.subr.bf16.mxu0 0
    %470 = vmatpush1.bf16.msra.mxu0 %v462
    %471 = vmatprep.subr.bf16.mxu0 0
    %472 = vmatpush1.bf16.msra.mxu0 %v463
    %473 = vmatprep.subr.bf16.mxu0 0
    %474 = vmatpush1.bf16.msra.mxu0 0
    %475 = vmatprep.subr.bf16.mxu0 0
    %476 = vmatpush1.bf16.msra.mxu0 0
    %477 = vmatprep.subr.bf16.mxu0 0
    %478 = vmatpush1.bf16.msra.mxu0 0
    %479 = vmatprep.subr.bf16.mxu0 0
    %480 = vmatpush1.bf16.msra.mxu0 0
    %481 = vmatprep.subr.bf16.mxu0 0
    %482 = vmatpush1.bf16.msra.mxu0 0
    %483 = vmatprep.subr.bf16.mxu0 0
    %484 = vmatpush1.bf16.msra.mxu0 0
    %485 = vmatprep.subr.bf16.mxu0 0
    %486 = vmatpush1.bf16.msra.mxu0 0
    %487 = vmatprep.subr.bf16.mxu0 0
    %488 = vmatpush1.bf16.msra.mxu0 0
    %489 = vmatprep.subr.bf16.mxu0 0
    %490 = vmatpush1.bf16.msra.mxu0 0
    %491 = vmatprep.subr.bf16.mxu0 0
    %492 = vmatpush1.bf16.msra.mxu0 0
    %493 = vmatprep.subr.bf16.mxu0 0
    %494 = vmatpush1.bf16.msra.mxu0 0
    %495 = vmatprep.subr.bf16.mxu0 0
    %496 = vmatpush1.bf16.msra.mxu0 0
    %497 = vmatprep.subr.bf16.mxu0 0
    %498 = vmatpush1.bf16.msra.mxu0 0
    %499 = vmatprep.subr.bf16.mxu0 0
    %500 = vmatpush1.bf16.msra.mxu0 0
    %501 = vmatprep.mubr.bf16.mxu0 0
    %502 = vmatmul.mubr.bf16.gmra.mrb[0].mxu0 %v467
    %v503 = vpop.f32.mrb[0].mxu0
    %v504 = vadd.f32 %v452, %v503
    %v505 = vpop.f32.mrb[0].mxu0
    %v506 = vpop.f32.mrb[0].mxu0
    %v507 = vpop.f32.mrb[0].mxu0
    %508 = vdwg.mxu0
    %vm509 = vcmask 64512
    %510 = vst.msk [vmem:[#allocation11] sm:$0xff] %vm509, %v504
    // Predicated region
    $region74: #{tpu_custom_call.1} parent=1 // pred_check
      _
    $region75: #{tpu_custom_call.1} parent=1 // pred_check_branch
      %512 = sbr.rel (0) target = $region77
    $region76: #{tpu_custom_call.1} parent=1 // pred_region
      %s514 = ssub.s32 128, 128
      %515 = vsyncadd [#allocation4], %s514
      %s517 = sshll.u32 [#allocation11], 4
      %s518 = int_to_ptr.vmem [resolvable:$true] %s517
      %520 = dma.vmem_to_hbm [thread:$0]  %s518, 128, %s13, [#allocation4]
    $region77: #{tpu_custom_call.1} parent=1 // pred_fallthru
      _
    // Predicated region
    $region78: #{tpu_custom_call.1} parent=1 // pred_check
      _
    $region79: #{tpu_custom_call.1} parent=1 // pred_check_branch
      %522 = sbr.rel (0) target = $region81
    $region80: #{tpu_custom_call.1} parent=1 // pred_region
      %523 = dma.done [#allocation4], 128
    $region81: #{tpu_custom_call.1} parent=1 // pred_fallthru
      _
    %524 = vsyncpa [#allocation3], 1
    %525 = vsyncpa [#allocation6], 1
    %526 = vsyncpa [#allocation9], 1
    %527 = vsyncpa [#allocation4], 1

</llo_original>
